<compile_context>
chip_gen: v5e
topology: v5e:2x2
jax: 0.10.0
libtpu: 0.0.40
codegen_flags: <defaults>
</compile_context>

<pallas_src>
import jax
import jax.numpy as jnp
from jax.experimental import pallas as pl
from jax.experimental.pallas import tpu as pltpu


def _round_up(v, m):
    return (v + m - 1) // m * m


# -----------------------------------------------------------------------------
# Kernels
# -----------------------------------------------------------------------------
def _linear_head_kernel(x_ref, w_ref, b_ref, o_ref):
    """Single-shot head: out = x @ W.T + b, all operands resident in VMEM."""
    acc = jax.lax.dot_general(
        x_ref[...], w_ref[...],
        dimension_numbers=(((1,), (1,)), ((), ())),  # contract in_dim of both (no transpose)
        preferred_element_type=jnp.float32,
    )
    o_ref[...] = (acc + b_ref[...].astype(jnp.float32)).astype(o_ref.dtype)


def _linear_head_tiled_kernel(x_ref, w_ref, b_ref, o_ref, acc_ref):
    """Tiled head: grid (M, N, K) with K (reduction) innermost, f32 accumulator."""
    k = pl.program_id(2)

    @pl.when(k == 0)
    def _():
        acc_ref[...] = jnp.zeros_like(acc_ref)

    acc_ref[...] += jax.lax.dot_general(
        x_ref[...], w_ref[...],
        dimension_numbers=(((1,), (1,)), ((), ())),
        preferred_element_type=jnp.float32,
    )

    @pl.when(k == pl.num_programs(2) - 1)
    def _():
        o_ref[...] = (acc_ref[...] + b_ref[...].astype(jnp.float32)).astype(o_ref.dtype)


# -----------------------------------------------------------------------------
# Wrappers
# -----------------------------------------------------------------------------
def prepare_linear_params(weight, bias):
    """One-time (parameter-load-time) packing of nn.Linear params.

    Keeps the PyTorch (n_classes, in_dim) layout (no transpose is ever done)
    and zero-pads the class axis to a multiple of 128 so every per-call output
    store is lane-dense. Returns (w_packed, b_packed, n_classes).
    """
    n_classes, _ = weight.shape
    n_pad = max(_round_up(n_classes, 128), 128)
    if n_pad != n_classes:
        weight = jnp.pad(weight, ((0, n_pad - n_classes), (0, 0)))
        bias = jnp.pad(bias, (0, n_pad - n_classes))
    return weight, bias.reshape(1, n_pad), n_classes


def linear_prediction_stage(x, w_packed, b_packed, n_classes, *,
                            block_m=128, block_n=128, block_k=512,
                            cast_inputs_to_bf16=False, force_tiled=None):
    """Forward pass of LinearPredictionStage: logits = x @ W.T + b."""
    B, D = x.shape
    n_pad, d_w = w_packed.shape
    assert d_w == D, "in_dim mismatch between x and packed weight"
    assert n_pad % 128 == 0, "use prepare_linear_params() to pack the weight/bias"
    out_dtype = x.dtype

    w = w_packed
    if cast_inputs_to_bf16:
        # bf16 MXU inputs (native on v6e/v7x); accumulation + epilogue stay f32.
        x = x.astype(jnp.bfloat16)
        w = w.astype(jnp.bfloat16)

    if force_tiled is None:
        footprint = (B * D + n_pad * D + B * n_pad) * x.dtype.itemsize
        use_tiled = footprint > 8 * 1024 * 1024  # stay comfortably inside VMEM
    else:
        use_tiled = force_tiled

    if not use_tiled:
        # Grid-less single-shot kernel: no per-step overhead, every operand is
        # mapped whole into VMEM. x's lane axis (D) is left unpadded on purpose:
        # padding it per call would cost more than the sparse lanes save.
        out = pl.pallas_call(
            _linear_head_kernel,
            out_shape=jax.ShapeDtypeStruct((B, n_pad), out_dtype),
            in_specs=[
                pl.BlockSpec(memory_space=pltpu.MemorySpace.VMEM),
                pl.BlockSpec(memory_space=pltpu.MemorySpace.VMEM),
                pl.BlockSpec(memory_space=pltpu.MemorySpace.VMEM),
            ],
            out_specs=pl.BlockSpec(memory_space=pltpu.MemorySpace.VMEM),
        )(x, w, b_packed)
    else:
        bn = block_n if n_pad % block_n == 0 else 128
        bm, bk = block_m, block_k
        b_pad = _round_up(B, bm)
        d_pad = _round_up(D, bk)
        if b_pad != B or d_pad != D:
            x = jnp.pad(x, ((0, b_pad - B), (0, d_pad - D)))
        if d_pad != D:
            w = jnp.pad(w, ((0, 0), (0, d_pad - D)))

        grid = (b_pad // bm, n_pad // bn, d_pad // bk)
        out = pl.pallas_call(
            _linear_head_tiled_kernel,
            out_shape=jax.ShapeDtypeStruct((b_pad, n_pad), out_dtype),
            grid_spec=pltpu.PrefetchScalarGridSpec(
                num_scalar_prefetch=0,
                grid=grid,
                in_specs=[
                    pl.BlockSpec((bm, bk), lambda i, j, k: (i, k)),  # x tile
                    pl.BlockSpec((bn, bk), lambda i, j, k: (j, k)),  # W tile (native layout)
                    pl.BlockSpec((1, bn), lambda i, j, k: (0, j)),   # bias tile
                ],
                out_specs=pl.BlockSpec((bm, bn), lambda i, j, k: (i, j)),
                scratch_shapes=[pltpu.VMEM((bm, bn), jnp.float32)],
            ),
            compiler_params=pltpu.CompilerParams(
                dimension_semantics=("parallel", "parallel", "arbitrary"),
                vmem_limit_bytes=32 * 1024 * 1024,
            ),
        )(x, w, b_packed)

    if out.shape != (B, n_classes):
        out = out[:B, :n_classes]
    return out


if __name__ == "__main__":
    # --- Small shapes implied by the module: model_output_dim=32, n_classes=16, batch=8.
    B, D, N = 8, 32, 16
    key = jax.random.PRNGKey(0)
    kx, kw, kb = jax.random.split(key, 3)

    # Deterministic init mimicking nn.Linear's uniform(-1/sqrt(D), 1/sqrt(D)).
    bound = 1.0 / (D ** 0.5)
    weight = jax.random.uniform(kw, (N, D), jnp.float32, minval=-bound, maxval=bound)
    bias = jax.random.uniform(kb, (N,), jnp.float32, minval=-bound, maxval=bound)
    x = jax.random.normal(kx, (B, D), jnp.float32)

    w_p, b_p, n_cls = prepare_linear_params(weight, bias)  # one-time packing
    out = jax.block_until_ready(linear_prediction_stage(x, w_p, b_p, n_cls))

    ref = jnp.dot(x, weight.T, precision=jax.lax.Precision.HIGHEST) + bias
    assert out.shape == (B, N)
    assert jnp.allclose(out, ref, atol=1e-4, rtol=1e-4)

    # --- Exercise the tiled (pipelined, accumulator) path at a modest larger size.
    B2, D2, N2 = 256, 512, 384
    k2x, k2w, k2b = jax.random.split(jax.random.PRNGKey(1), 3)
    bound2 = 1.0 / (D2 ** 0.5)
    weight2 = jax.random.uniform(k2w, (N2, D2), jnp.float32, minval=-bound2, maxval=bound2)
    bias2 = jax.random.uniform(k2b, (N2,), jnp.float32, minval=-bound2, maxval=bound2)
    x2 = jax.random.normal(k2x, (B2, D2), jnp.float32)

    w2_p, b2_p, n2_cls = prepare_linear_params(weight2, bias2)
    out2 = jax.block_until_ready(
        linear_prediction_stage(x2, w2_p, b2_p, n2_cls,
                                block_m=128, block_n=128, block_k=256,
                                force_tiled=True))
    ref2 = jnp.dot(x2, weight2.T, precision=jax.lax.Precision.HIGHEST) + bias2
    assert out2.shape == (B2, N2)
    assert jnp.allclose(out2, ref2, atol=1e-4, rtol=1e-4)

    print("KERNEL_OK")
</pallas_src>

<mosaic_0001>
module attributes {stable_mosaic.version = 11 : i64} {
  func.func @_linear_head_kernel(%arg0: memref<8x32xf32, #tpu.memory_space<vmem>>, %arg1: memref<128x32xf32, #tpu.memory_space<vmem>>, %arg2: memref<1x128xf32, #tpu.memory_space<vmem>>, %arg3: memref<8x128xf32, #tpu.memory_space<vmem>>) attributes {dimension_semantics = [], scalar_prefetch = 0 : i64, scratch_operands = 0 : i64, tpu.core_type = #tpu.core_type<tc>} {
    %c0 = arith.constant 0 : index
    %c0_0 = arith.constant 0 : index
    %0 = vector.load %arg0[%c0, %c0_0] : memref<8x32xf32, #tpu.memory_space<vmem>>, vector<8x32xf32>
    %c0_1 = arith.constant 0 : index
    %c0_2 = arith.constant 0 : index
    %1 = vector.load %arg1[%c0_1, %c0_2] : memref<128x32xf32, #tpu.memory_space<vmem>>, vector<128x32xf32>
    %cst = arith.constant dense<0.000000e+00> : vector<8x128xf32>
    %2 = tpu.matmul %0, %1, %cst {dimension_numbers = #tpu.dot_dimension_numbers<[1], [1], [0], [0], [0, 0, 1, 0], [], []>} : vector<8x32xf32>, vector<128x32xf32>, vector<8x128xf32> -> vector<8x128xf32>
    %c0_3 = arith.constant 0 : index
    %c0_4 = arith.constant 0 : index
    %3 = vector.load %arg2[%c0_3, %c0_4] : memref<1x128xf32, #tpu.memory_space<vmem>>, vector<1x128xf32>
    %4 = vector.broadcast %3 : vector<1x128xf32> to vector<8x128xf32>
    %5 = arith.addf %2, %4 : vector<8x128xf32>
    %c0_5 = arith.constant 0 : index
    %c0_6 = arith.constant 0 : index
    %6 = vector.load %arg3[%c0_5, %c0_6] : memref<8x128xf32, #tpu.memory_space<vmem>>, vector<8x128xf32>
    tpu.vector_store %arg3[%c0_5, %c0_6], %5 {strides = array<i32>} : memref<8x128xf32, #tpu.memory_space<vmem>>, vector<8x128xf32>,
    return
  }
}

</mosaic_0001>

<llo_original>
// kernel: tpu_custom_call.1
$region0: #{tpu_custom_call.1}
  #allocation0 [shape = 'u32[]', space=smem, size = 0x4, offset = 0x4, fixed_abs, tag = 'smem constant byte address 0x4 - core index']
  #allocation1 [shape = 'u32[72,128]{1,0:T(1,128)}', space=vmem, size = 0x9000, scoped, tag = 'internal scratch']
  %s0 = inlined_call_operand.vmem [shape: f32[8,32], index: 0, kind: input, shape index: {}]
  %s1 = inlined_call_operand.vmem [shape: f32[128,32], index: 1, kind: input, shape index: {}]
  %s2 = inlined_call_operand.vmem [shape: f32[1,128], index: 2, kind: input, shape index: {}]
  %s3 = inlined_call_operand.hbm [shape: f32[8,128], index: 3, kind: output, shape index: {}]
  %s4 = sld [smem:[#allocation0]]
  $region22: #{tpu_custom_call.1} parent=0
    _
  %s6 = ssub.s32 1, %s4
  %s7 = scalar_select 0, %s6, %s4
  $region1: #{tpu_custom_call.1} parent=0
    #allocation2 [shape = 'u8[4096]{0}', space=vmem, size = 0x1000, scoped, tag = 'output window, operand 0, single buffered']
    #allocation3 [shape = 's32[1]{0}', space=sflag, size = 0x4, scoped, tag = 'scoped memory for tpu_custom_call.1']
    %8 = vsyncpa [#allocation3], 0
    // Predicated region
    $region2: #{tpu_custom_call.1} parent=1 // pred_check
      _
    $region3: #{tpu_custom_call.1} parent=1 // pred_check_branch
      %10 = sbr.rel (0) target = $region5
    $region4: #{tpu_custom_call.1} parent=1 // pred_region
      _
    $region5: #{tpu_custom_call.1} parent=1 // pred_fallthru
      _
    // Predicated region
    $region6: #{tpu_custom_call.1} parent=1 // pred_check
      _
    $region7: #{tpu_custom_call.1} parent=1 // pred_check_branch
      %12 = sbr.rel (0) target = $region9
    $region8: #{tpu_custom_call.1} parent=1 // pred_region
      _
    $region9: #{tpu_custom_call.1} parent=1 // pred_fallthru
      _
    // Predicated region
    $region10: #{tpu_custom_call.1} parent=1 // pred_check
      _
    $region11: #{tpu_custom_call.1} parent=1 // pred_check_branch
      %14 = sbr.rel (0) target = $region13
    $region12: #{tpu_custom_call.1} parent=1 // pred_region
      _
    $region13: #{tpu_custom_call.1} parent=1 // pred_fallthru
      _
    %v15 = vld [vmem:[%s0] sm:$0xff]
    %v16 = vld [vmem:[%s1] sm:$0xff]
    %v17 = vld [vmem:[%s1 + $0x8] sm:$0xff]
    %v18 = vld [vmem:[%s1 + $0x10] sm:$0xff]
    %v19 = vld [vmem:[%s1 + $0x18] sm:$0xff]
    %v20 = vld [vmem:[%s1 + $0x20] sm:$0xff]
    %v21 = vld [vmem:[%s1 + $0x28] sm:$0xff]
    %v22 = vld [vmem:[%s1 + $0x30] sm:$0xff]
    %v23 = vld [vmem:[%s1 + $0x38] sm:$0xff]
    %v24 = vld [vmem:[%s1 + $0x40] sm:$0xff]
    %v25 = vld [vmem:[%s1 + $0x48] sm:$0xff]
    %v26 = vld [vmem:[%s1 + $0x50] sm:$0xff]
    %v27 = vld [vmem:[%s1 + $0x58] sm:$0xff]
    %v28 = vld [vmem:[%s1 + $0x60] sm:$0xff]
    %v29 = vld [vmem:[%s1 + $0x68] sm:$0xff]
    %v30 = vld [vmem:[%s1 + $0x70] sm:$0xff]
    %v31 = vld [vmem:[%s1 + $0x78] sm:$0xff]
    %v32 = vld [vmem:[%s2] sm:$0x1]
    %v34 = vperm.slane %v32, 0
    %vm36 = vcmask 261120
    %v38 = vsel %vm36, %v15, 0
    %v41 = vsel %vm36, %v16, 0
    %v44 = vsel %vm36, %v17, 0
    %v47 = vsel %vm36, %v18, 0
    %v50 = vsel %vm36, %v19, 0
    %v53 = vsel %vm36, %v20, 0
    %v56 = vsel %vm36, %v21, 0
    %v59 = vsel %vm36, %v22, 0
    %v62 = vsel %vm36, %v23, 0
    %v65 = vsel %vm36, %v24, 0
    %v68 = vsel %vm36, %v25, 0
    %v71 = vsel %vm36, %v26, 0
    %v74 = vsel %vm36, %v27, 0
    %v77 = vsel %vm36, %v28, 0
    %v80 = vsel %vm36, %v29, 0
    %v83 = vsel %vm36, %v30, 0
    %v86 = vsel %vm36, %v31, 0
    %88 = vmatpush.xpose.msra.mxu0 %v86
    %89 = vmatpush.xpose.msra.mxu0 %v83
    %90 = vmatpush.xpose.msra.mxu0 %v80
    %91 = vmatpush.xpose.msra.mxu0 %v77
    %92 = vmatpush.xpose.msra.mxu0 %v74
    %93 = vmatpush.xpose.msra.mxu0 %v71
    %94 = vmatpush.xpose.msra.mxu0 %v68
    %95 = vmatpush.xpose.msra.mxu0 %v65
    %96 = vmatpush.xpose.msra.mxu0 %v62
    %97 = vmatpush.xpose.msra.mxu0 %v59
    %98 = vmatpush.xpose.msra.mxu0 %v56
    %99 = vmatpush.xpose.msra.mxu0 %v53
    %100 = vmatpush.xpose.msra.mxu0 %v50
    %101 = vmatpush.xpose.msra.mxu0 %v47
    %102 = vmatpush.xpose.msra.mxu0 %v44
    %103 = vmatpush.xpose.msra.mxu0 %v41
    %104 = vmatmul.f32.gmra.mxu0 %v38
    %v105 = vpop.f32.mrf.mxu0
    %v106 = vadd.f32 %v34, %v105
    %107 = vdwg.mxu0
    %108 = vst [vmem:[#allocation2] sm:$0xff] %v106
    // Predicated region
    $region14: #{tpu_custom_call.1} parent=1 // pred_check
      _
    $region15: #{tpu_custom_call.1} parent=1 // pred_check_branch
      %110 = sbr.rel (0) target = $region17
    $region16: #{tpu_custom_call.1} parent=1 // pred_region
      %112 = vsyncadd [#allocation3], 0
      %s114 = sshll.u32 [#allocation2], 4
      %s115 = int_to_ptr.vmem [resolvable:$true] %s114
      %s116 = sshll.u32 %s3, 4
      %s117 = int_to_ptr.hbm [resolvable:$true] %s116
      %119 = dma.vmem_to_hbm [thread:$0]  %s115, 128, %s117, [#allocation3]
    $region17: #{tpu_custom_call.1} parent=1 // pred_fallthru
      _
    // Predicated region
    $region18: #{tpu_custom_call.1} parent=1 // pred_check
      _
    $region19: #{tpu_custom_call.1} parent=1 // pred_check_branch
      %121 = sbr.rel (0) target = $region21
    $region20: #{tpu_custom_call.1} parent=1 // pred_region
      %123 = dma.done [#allocation3], 128
    $region21: #{tpu_custom_call.1} parent=1 // pred_fallthru
      _
    %124 = vsyncpa [#allocation3], 1

</llo_original>
